<compile_context>
chip_gen: v7x
topology: tpu7x:2x2x1
jax: 0.10.0
libtpu: 0.0.40
codegen_flags: <defaults>
</compile_context>

<pallas_src>
import jax
import jax.numpy as jnp
from jax import lax
from jax.experimental import pallas as pl
from jax.experimental.pallas import tpu as pltpu

_LANE = 128
# Contract the last dim of both operands: A (m, k) x B (n, k) -> (m, n).
_NT_DIMS = (((1,), (1,)), ((), ()))


def _sigmoid(x):
    # Mathematically identical to the logistic sigmoid; a single EUP tanh push
    # plus cheap VPU mul/add instead of exp + divide (two EUP pushes).
    return 0.5 * (jnp.tanh(0.5 * x) + 1.0)


def _round_up(x, m):
    return -(-x // m) * m


def _choose_tiling(B, tile_b=None):
    """Pick (tile_b, padded_B). tile_b is lane-aligned; padded_B % tile_b == 0."""
    if tile_b is not None:
        tile_b = int(tile_b)
        assert tile_b % _LANE == 0, "explicit tile_b must be a multiple of 128"
        return tile_b, _round_up(B, tile_b)

    pad_b = _round_up(B, _LANE)
    # Small / moderate batches: one big tile (single grid step) amortizes the
    # ~0.35us per-grid-step overhead -- best case for 1-TC v5e/v6e.
    if pad_b <= 4096:
        return pad_b, pad_b
    # Large PINN collocation batches: big (<=8192) lane-aligned tiles, and an
    # even number of steps >= 2 so the "parallel" batch axis gives both v7x
    # TensorCores real work. Also guards against the old tile_b=B fallback
    # that could blow v7x's 64 MiB VMEM for huge batches.
    steps = max(2, _round_up(pad_b, 8192) // 8192)
    if steps % 2:
        steps += 1
    tile_b = _round_up(-(-pad_b // steps), _LANE)
    return tile_b, steps * tile_b


def fcn_kernel_with_hidden(x_ref, w_in_ref, b_in_ref, w_h_ref, b_h_ref,
                           w_out_ref, b_out_ref, o_ref):
    """Fused MLP forward for one batch tile; activations in (features, batch).

    x_ref     : (TB, N_in)      VMEM   (batch-major, as stored in HBM)
    w_in_ref  : (H, N_in)       VMEM   (PyTorch (out, in) layout)
    b_in_ref  : (H, 1)          VMEM
    w_h_ref   : (L-1, H, H)     VMEM   (stacked hidden layers)
    b_h_ref   : (L-1, H, 1)     VMEM
    w_out_ref : (N_out, H)      VMEM
    b_out_ref : (N_out, 1)      VMEM
    o_ref     : (N_out, TB)     VMEM   (lane-dense over batch)
    """
    # First layer contracts the feature axis of x in-kernel: (H, TB).
    h = _sigmoid(
        lax.dot_general(w_in_ref[...], x_ref[...], _NT_DIMS,
                        preferred_element_type=jnp.float32)
        + b_in_ref[...])

    n_hidden = w_h_ref.shape[0]
    for i in range(n_hidden):          # static trip count -> unrolled
        h = _sigmoid(
            jnp.dot(w_h_ref[i], h, preferred_element_type=jnp.float32)
            + b_h_ref[i])

    out = (jnp.dot(w_out_ref[...], h, preferred_element_type=jnp.float32)
           + b_out_ref[...])
    o_ref[...] = out.astype(o_ref.dtype)


def fcn_kernel_no_hidden(x_ref, w_in_ref, b_in_ref, w_out_ref, b_out_ref,
                         o_ref):
    """Same as above for N_Layers == 1 (no stacked hidden weights)."""
    h = _sigmoid(
        lax.dot_general(w_in_ref[...], x_ref[...], _NT_DIMS,
                        preferred_element_type=jnp.float32)
        + b_in_ref[...])
    out = (jnp.dot(w_out_ref[...], h, preferred_element_type=jnp.float32)
           + b_out_ref[...])
    o_ref[...] = out.astype(o_ref.dtype)


def fcn_forward(x, params, *, tile_b=None):
    """Run the fused FCN forward pass via pallas_call.

    x      : (B, N_in) f32
    params : (w_in (H,N_in), b_in (H,1), w_h (L-1,H,H), b_h (L-1,H,1),
              w_out (N_out,H), b_out (N_out,1))
    returns: (B, N_out) f32
    """
    w_in, b_in, w_h, b_h, w_out, b_out = params
    B, n_in = x.shape
    H = w_in.shape[0]
    n_out = w_out.shape[0]
    n_hidden_layers = w_h.shape[0]

    tile_b, pad_b = _choose_tiling(B, tile_b)
    if pad_b != B:
        # Pad the batch up to a whole number of lane-aligned tiles; padded rows
        # are computed (cheap) and sliced off at the end.
        x = jnp.pad(x, ((0, pad_b - B), (0, 0)))

    grid = (pad_b // tile_b,)

    in_specs = [
        pl.BlockSpec((tile_b, n_in), lambda i: (i, 0)),          # x (batch-major)
        pl.BlockSpec((H, n_in), lambda i: (0, 0)),               # w_in (resident)
        pl.BlockSpec((H, 1), lambda i: (0, 0)),                  # b_in (resident)
    ]
    args = [x, w_in, b_in]

    if n_hidden_layers > 0:
        kernel = fcn_kernel_with_hidden
        in_specs += [
            pl.BlockSpec((n_hidden_layers, H, H), lambda i: (0, 0, 0)),  # w_h
            pl.BlockSpec((n_hidden_layers, H, 1), lambda i: (0, 0, 0)),  # b_h
        ]
        args += [w_h, b_h]
    else:
        kernel = fcn_kernel_no_hidden

    in_specs += [
        pl.BlockSpec((n_out, H), lambda i: (0, 0)),              # w_out (resident)
        pl.BlockSpec((n_out, 1), lambda i: (0, 0)),              # b_out (resident)
    ]
    args += [w_out, b_out]

    out_specs = pl.BlockSpec((n_out, tile_b), lambda i: (0, i))  # out^T (lane-dense)

    # Advisory scheduling hints for XLA around this (tiny) custom call.
    flops = 2 * pad_b * (n_in * H + n_hidden_layers * H * H + H * n_out)
    transcendentals = pad_b * H * (1 + n_hidden_layers)
    param_bytes = sum(int(a.size) * a.dtype.itemsize
                      for a in (w_in, b_in, w_h, b_h, w_out, b_out))
    # Weight blocks have constant index_maps -> resident across grid steps,
    # so their bytes are counted exactly once.
    bytes_accessed = (int(x.size) * x.dtype.itemsize
                      + pad_b * n_out * x.dtype.itemsize
                      + param_bytes)
    cost = pl.CostEstimate(flops=int(flops),
                           transcendentals=int(transcendentals),
                           bytes_accessed=int(bytes_accessed))

    # TODO(synk): if this MLP is ever scaled up (H >= 1024, many layers), the
    # fully-resident stacked w_h block should get its own grid axis (or be
    # streamed via pl.ANY + manual DMA) to fit v7x's 64 MiB VMEM.
    out_t = pl.pallas_call(
        kernel,
        out_shape=jax.ShapeDtypeStruct((n_out, pad_b), x.dtype),
        grid_spec=pl.GridSpec(
            grid=grid,
            in_specs=in_specs,
            out_specs=out_specs,
        ),
        compiler_params=pltpu.CompilerParams(
            dimension_semantics=("parallel",)),
        cost_estimate=cost,
    )(*args)

    return out_t[:, :B].T                              # (B, N_out)


def init_fcn_params(key, n_input, n_output, n_hidden, n_layers):
    """Deterministic init mimicking PyTorch nn.Linear (uniform +/- 1/sqrt(fan_in)).

    Weights are kept in PyTorch's (out, in) layout; biases as (out, 1) columns.
    """
    keys = jax.random.split(key, 2 * (n_layers + 1))

    def linear_init(kw, kb, fan_in, fan_out):
        bound = 1.0 / jnp.sqrt(jnp.float32(fan_in))
        w = jax.random.uniform(kw, (fan_out, fan_in), jnp.float32, -bound, bound)
        b = jax.random.uniform(kb, (fan_out, 1), jnp.float32, -bound, bound)
        return w, b

    # fcs: Linear(N_Input, N_Hidden)
    w_in, b_in = linear_init(keys[0], keys[1], n_input, n_hidden)

    # fch: (N_Layers - 1) x Linear(N_Hidden, N_Hidden)
    w_h_list, b_h_list = [], []
    for l in range(n_layers - 1):
        w, b = linear_init(keys[2 + 2 * l], keys[3 + 2 * l], n_hidden, n_hidden)
        w_h_list.append(w)
        b_h_list.append(b)
    if n_layers - 1 > 0:
        w_h = jnp.stack(w_h_list, axis=0)                   # (L-1, H, H)
        b_h = jnp.stack(b_h_list, axis=0)                   # (L-1, H, 1)
    else:
        w_h = jnp.zeros((0, n_hidden, n_hidden), jnp.float32)
        b_h = jnp.zeros((0, n_hidden, 1), jnp.float32)

    # fce: Linear(N_Hidden, N_Output)
    w_out, b_out = linear_init(keys[2 * n_layers], keys[2 * n_layers + 1],
                               n_hidden, n_output)
    return (w_in, b_in, w_h, b_h, w_out, b_out)


def fcn_reference(x, params):
    """Pure-JAX reference of the same forward pass ((out, in) weights)."""
    w_in, b_in, w_h, b_h, w_out, b_out = params
    h = jax.nn.sigmoid(x @ w_in.T + b_in[:, 0])
    for i in range(w_h.shape[0]):
        h = jax.nn.sigmoid(h @ w_h[i].T + b_h[i, :, 0])
    return h @ w_out.T + b_out[:, 0]


if __name__ == "__main__":
    # Burgers PINN-style sizes: input (x, t) = 2 features, output u = 1, small MLP.
    N_Input, N_Output, N_Hidden, N_Layers = 2, 1, 32, 3

    key = jax.random.PRNGKey(0)
    k_params, k_x1, k_x2 = jax.random.split(key, 3)
    params = init_fcn_params(k_params, N_Input, N_Output, N_Hidden, N_Layers)

    # 1) Tiny batch (single padded 128-wide tile, one grid step).
    B1 = 16
    x1 = jax.random.normal(k_x1, (B1, N_Input), jnp.float32)
    out1 = jax.block_until_ready(fcn_forward(x1, params))
    ref1 = fcn_reference(x1, params)
    assert out1.shape == (B1, N_Output)
    assert jnp.allclose(out1, ref1, atol=1e-4, rtol=1e-4), "mismatch vs reference (B=16)"

    # 2) Unaligned batch + explicit multi-step grid (exercises padding and the
    #    multi-tile "parallel" batch axis path).
    B2 = 300
    x2 = jax.random.normal(k_x2, (B2, N_Input), jnp.float32)
    out2 = jax.block_until_ready(fcn_forward(x2, params, tile_b=128))
    ref2 = fcn_reference(x2, params)
    assert out2.shape == (B2, N_Output)
    assert jnp.allclose(out2, ref2, atol=1e-4, rtol=1e-4), "mismatch vs reference (B=300)"

    print("KERNEL_OK")
</pallas_src>

<mosaic_0001>
module attributes {stable_mosaic.version = 11 : i64} {
  func.func @fcn_kernel_with_hidden(%arg0: i32, %arg1: memref<128x2xf32, #tpu.memory_space<vmem>>, %arg2: memref<32x2xf32, #tpu.memory_space<vmem>>, %arg3: memref<32x1xf32, #tpu.memory_space<vmem>>, %arg4: memref<2x32x32xf32, #tpu.memory_space<vmem>>, %arg5: memref<2x32x1xf32, #tpu.memory_space<vmem>>, %arg6: memref<1x32xf32, #tpu.memory_space<vmem>>, %arg7: memref<1x1xf32, #tpu.memory_space<vmem>>, %arg8: memref<1x128xf32, #tpu.memory_space<vmem>>) attributes {dimension_semantics = [#tpu.dimension_semantics<parallel>], iteration_bounds = array<i64: 1>, scalar_prefetch = 0 : i64, scratch_operands = 0 : i64, tpu.core_type = #tpu.core_type<tc>, window_params = [{transform_indices = @transform_0, window_bounds = array<i64: 128, 2>}, {pipeline_mode = #tpu.pipeline_mode<synchronous>, transform_indices = @transform_1, window_bounds = array<i64: 32, 2>}, {pipeline_mode = #tpu.pipeline_mode<synchronous>, transform_indices = @transform_2, window_bounds = array<i64: 32, 1>}, {pipeline_mode = #tpu.pipeline_mode<synchronous>, transform_indices = @transform_3, window_bounds = array<i64: 2, 32, 32>}, {pipeline_mode = #tpu.pipeline_mode<synchronous>, transform_indices = @transform_4, window_bounds = array<i64: 2, 32, 1>}, {pipeline_mode = #tpu.pipeline_mode<synchronous>, transform_indices = @transform_5, window_bounds = array<i64: 1, 32>}, {pipeline_mode = #tpu.pipeline_mode<synchronous>, transform_indices = @transform_6, window_bounds = array<i64: 1, 1>}, {transform_indices = @transform_7, window_bounds = array<i64: 1, 128>}]} {
    %c0 = arith.constant 0 : index
    %c0_0 = arith.constant 0 : index
    %0 = vector.load %arg2[%c0, %c0_0] : memref<32x2xf32, #tpu.memory_space<vmem>>, vector<32x2xf32>
    %c0_1 = arith.constant 0 : index
    %c0_2 = arith.constant 0 : index
    %1 = vector.load %arg1[%c0_1, %c0_2] : memref<128x2xf32, #tpu.memory_space<vmem>>, vector<128x2xf32>
    %cst = arith.constant dense<0.000000e+00> : vector<32x128xf32>
    %2 = tpu.matmul %0, %1, %cst {dimension_numbers = #tpu.dot_dimension_numbers<[1], [1], [0], [0], [0, 0, 1, 0], [], []>} : vector<32x2xf32>, vector<128x2xf32>, vector<32x128xf32> -> vector<32x128xf32>
    %c0_3 = arith.constant 0 : index
    %c0_4 = arith.constant 0 : index
    %3 = vector.load %arg3[%c0_3, %c0_4] : memref<32x1xf32, #tpu.memory_space<vmem>>, vector<32x1xf32>
    %4 = vector.broadcast %3 : vector<32x1xf32> to vector<32x128xf32>
    %5 = arith.addf %2, %4 : vector<32x128xf32>
    %cst_5 = arith.constant 5.000000e-01 : f32
    %6 = vector.broadcast %cst_5 : f32 to vector<32x128xf32>
    %7 = arith.mulf %6, %5 : vector<32x128xf32>
    %8 = math.tanh %7 : vector<32x128xf32>
    %cst_6 = arith.constant 1.000000e+00 : f32
    %9 = vector.broadcast %cst_6 : f32 to vector<32x128xf32>
    %10 = arith.addf %8, %9 : vector<32x128xf32>
    %cst_7 = arith.constant 5.000000e-01 : f32
    %11 = vector.broadcast %cst_7 : f32 to vector<32x128xf32>
    %12 = arith.mulf %11, %10 : vector<32x128xf32>
    %c0_8 = arith.constant 0 : index
    %c0_9 = arith.constant 0 : index
    %c0_10 = arith.constant 0 : index
    %13 = vector.load %arg4[%c0_8, %c0_9, %c0_10] : memref<2x32x32xf32, #tpu.memory_space<vmem>>, vector<1x32x32xf32>
    %14 = vector.shape_cast %13 : vector<1x32x32xf32> to vector<32x32xf32>
    %cst_11 = arith.constant dense<0.000000e+00> : vector<32x128xf32>
    %15 = tpu.matmul %14, %12, %cst_11 {dimension_numbers = #tpu.dot_dimension_numbers<[1], [0], [0], [1], [0, 0, 1, 1], [], []>} : vector<32x32xf32>, vector<32x128xf32>, vector<32x128xf32> -> vector<32x128xf32>
    %c0_12 = arith.constant 0 : index
    %c0_13 = arith.constant 0 : index
    %c0_14 = arith.constant 0 : index
    %16 = vector.load %arg5[%c0_12, %c0_13, %c0_14] : memref<2x32x1xf32, #tpu.memory_space<vmem>>, vector<1x32x1xf32>
    %17 = vector.shape_cast %16 : vector<1x32x1xf32> to vector<32x1xf32>
    %18 = vector.broadcast %17 : vector<32x1xf32> to vector<32x128xf32>
    %19 = arith.addf %15, %18 : vector<32x128xf32>
    %cst_15 = arith.constant 5.000000e-01 : f32
    %20 = vector.broadcast %cst_15 : f32 to vector<32x128xf32>
    %21 = arith.mulf %20, %19 : vector<32x128xf32>
    %22 = math.tanh %21 : vector<32x128xf32>
    %cst_16 = arith.constant 1.000000e+00 : f32
    %23 = vector.broadcast %cst_16 : f32 to vector<32x128xf32>
    %24 = arith.addf %22, %23 : vector<32x128xf32>
    %cst_17 = arith.constant 5.000000e-01 : f32
    %25 = vector.broadcast %cst_17 : f32 to vector<32x128xf32>
    %26 = arith.mulf %25, %24 : vector<32x128xf32>
    %c1 = arith.constant 1 : index
    %c0_18 = arith.constant 0 : index
    %c0_19 = arith.constant 0 : index
    %27 = vector.load %arg4[%c1, %c0_18, %c0_19] : memref<2x32x32xf32, #tpu.memory_space<vmem>>, vector<1x32x32xf32>
    %28 = vector.shape_cast %27 : vector<1x32x32xf32> to vector<32x32xf32>
    %cst_20 = arith.constant dense<0.000000e+00> : vector<32x128xf32>
    %29 = tpu.matmul %28, %26, %cst_20 {dimension_numbers = #tpu.dot_dimension_numbers<[1], [0], [0], [1], [0, 0, 1, 1], [], []>} : vector<32x32xf32>, vector<32x128xf32>, vector<32x128xf32> -> vector<32x128xf32>
    %c1_21 = arith.constant 1 : index
    %c0_22 = arith.constant 0 : index
    %c0_23 = arith.constant 0 : index
    %30 = vector.load %arg5[%c1_21, %c0_22, %c0_23] : memref<2x32x1xf32, #tpu.memory_space<vmem>>, vector<1x32x1xf32>
    %31 = vector.shape_cast %30 : vector<1x32x1xf32> to vector<32x1xf32>
    %32 = vector.broadcast %31 : vector<32x1xf32> to vector<32x128xf32>
    %33 = arith.addf %29, %32 : vector<32x128xf32>
    %cst_24 = arith.constant 5.000000e-01 : f32
    %34 = vector.broadcast %cst_24 : f32 to vector<32x128xf32>
    %35 = arith.mulf %34, %33 : vector<32x128xf32>
    %36 = math.tanh %35 : vector<32x128xf32>
    %cst_25 = arith.constant 1.000000e+00 : f32
    %37 = vector.broadcast %cst_25 : f32 to vector<32x128xf32>
    %38 = arith.addf %36, %37 : vector<32x128xf32>
    %cst_26 = arith.constant 5.000000e-01 : f32
    %39 = vector.broadcast %cst_26 : f32 to vector<32x128xf32>
    %40 = arith.mulf %39, %38 : vector<32x128xf32>
    %c0_27 = arith.constant 0 : index
    %c0_28 = arith.constant 0 : index
    %41 = vector.load %arg6[%c0_27, %c0_28] : memref<1x32xf32, #tpu.memory_space<vmem>>, vector<1x32xf32>
    %cst_29 = arith.constant dense<0.000000e+00> : vector<1x128xf32>
    %42 = tpu.matmul %41, %40, %cst_29 {dimension_numbers = #tpu.dot_dimension_numbers<[1], [0], [0], [1], [0, 0, 1, 1], [], []>} : vector<1x32xf32>, vector<32x128xf32>, vector<1x128xf32> -> vector<1x128xf32>
    %c0_30 = arith.constant 0 : index
    %c0_31 = arith.constant 0 : index
    %43 = vector.load %arg7[%c0_30, %c0_31] : memref<1x1xf32, #tpu.memory_space<vmem>>, vector<1x1xf32>
    %44 = vector.broadcast %43 : vector<1x1xf32> to vector<1x128xf32>
    %45 = arith.addf %42, %44 : vector<1x128xf32>
    %c0_32 = arith.constant 0 : index
    %c0_33 = arith.constant 0 : index
    %46 = vector.load %arg8[%c0_32, %c0_33] : memref<1x128xf32, #tpu.memory_space<vmem>>, vector<1x128xf32>
    tpu.vector_store %arg8[%c0_32, %c0_33], %45 {strides = array<i32>} : memref<1x128xf32, #tpu.memory_space<vmem>>, vector<1x128xf32>,
    return
  }
  func.func @transform_0(%arg0: i32) -> (i32, i32) {
    %c0_i32 = arith.constant 0 : i32
    %c0_i32_0 = arith.constant 0 : i32
    return %arg0, %c0_i32 : i32, i32
  }
  func.func @transform_1(%arg0: i32) -> (i32, i32) {
    %c0_i32 = arith.constant 0 : i32
    %c0_i32_0 = arith.constant 0 : i32
    %c0_i32_1 = arith.constant 0 : i32
    return %c0_i32, %c0_i32_0 : i32, i32
  }
  func.func @transform_2(%arg0: i32) -> (i32, i32) {
    %c0_i32 = arith.constant 0 : i32
    %c0_i32_0 = arith.constant 0 : i32
    %c0_i32_1 = arith.constant 0 : i32
    return %c0_i32, %c0_i32_0 : i32, i32
  }
  func.func @transform_3(%arg0: i32) -> (i32, i32, i32) {
    %c0_i32 = arith.constant 0 : i32
    %c0_i32_0 = arith.constant 0 : i32
    %c0_i32_1 = arith.constant 0 : i32
    %c0_i32_2 = arith.constant 0 : i32
    return %c0_i32, %c0_i32_0, %c0_i32_1 : i32, i32, i32
  }
  func.func @transform_4(%arg0: i32) -> (i32, i32, i32) {
    %c0_i32 = arith.constant 0 : i32
    %c0_i32_0 = arith.constant 0 : i32
    %c0_i32_1 = arith.constant 0 : i32
    %c0_i32_2 = arith.constant 0 : i32
    return %c0_i32, %c0_i32_0, %c0_i32_1 : i32, i32, i32
  }
  func.func @transform_5(%arg0: i32) -> (i32, i32) {
    %c0_i32 = arith.constant 0 : i32
    %c0_i32_0 = arith.constant 0 : i32
    %c0_i32_1 = arith.constant 0 : i32
    return %c0_i32, %c0_i32_0 : i32, i32
  }
  func.func @transform_6(%arg0: i32) -> (i32, i32) {
    %c0_i32 = arith.constant 0 : i32
    %c0_i32_0 = arith.constant 0 : i32
    %c0_i32_1 = arith.constant 0 : i32
    return %c0_i32, %c0_i32_0 : i32, i32
  }
  func.func @transform_7(%arg0: i32) -> (i32, i32) {
    %c0_i32 = arith.constant 0 : i32
    %c0_i32_0 = arith.constant 0 : i32
    return %c0_i32, %arg0 : i32, i32
  }
}

</mosaic_0001>

<llo_original>
// kernel: tpu_custom_call.1
$region0: #{tpu_custom_call.1}
  #allocation0 [shape = 'u32[]', space=smem, size = 0x4, offset = 0x4, fixed_abs, tag = 'smem constant byte address 0x4 - core index']
  #allocation1 [shape = 'u32[144,128]{1,0:T(1,128)}', space=vmem, size = 0x12000, scoped, tag = 'internal scratch']
  #allocation2 [shape = 'f32[1,1]{1,0:T(1,128)S(1)}', space=vmem, size = 0x200, scoped, tag = 'scoped memory for tpu_custom_call.1']
  %s0 = inlined_call_operand.vmem [shape: f32[128,2], index: 0, kind: input, shape index: {}]
  %s1 = inlined_call_operand.vmem [shape: f32[32,2], index: 1, kind: input, shape index: {}]
  %s2 = inlined_call_operand.vmem [shape: f32[32,1], index: 2, kind: input, shape index: {}]
  %s3 = inlined_call_operand.vmem [shape: f32[2,32,32], index: 3, kind: input, shape index: {}]
  %s4 = inlined_call_operand.vmem [shape: f32[2,32,1], index: 4, kind: input, shape index: {}]
  %s5 = inlined_call_operand.vmem [shape: f32[1,32], index: 5, kind: input, shape index: {}]
  %s6 = inlined_call_operand.<no memory space> [shape: f32[1,1], index: 6, kind: input, shape index: {}]
  %s7 = inlined_call_operand.hbm [shape: f32[1,128], index: 7, kind: output, shape index: {}]
  %s8 = sld [smem:[#allocation0]]
  $region38: #{tpu_custom_call.1} parent=0
    _
  %s10 = ssub.s32 1, %s8
  %s11 = scalar_select 0, %s10, %s8
  %v12 = vstv %s6
  %13 = vst [vmem:[#allocation2] sm:$0x1] %v12
  $region1: #{tpu_custom_call.1} parent=0
    #allocation3 [shape = 'u8[512]{0}', space=vmem, size = 0x400, scoped, tag = 'output window, operand 0, single buffered']
    #allocation4 [shape = 's32[1]{0}', space=sflag, size = 0x4, scoped, tag = 'scoped memory for tpu_custom_call.1']
    %14 = vsyncpa [#allocation4], 0
    // Predicated region
    $region2: #{tpu_custom_call.1} parent=1 // pred_check
      _
    $region3: #{tpu_custom_call.1} parent=1 // pred_check_branch
      %16 = sbr.rel (0) target = $region5
    $region4: #{tpu_custom_call.1} parent=1 // pred_region
      _
    $region5: #{tpu_custom_call.1} parent=1 // pred_fallthru
      _
    // Predicated region
    $region6: #{tpu_custom_call.1} parent=1 // pred_check
      _
    $region7: #{tpu_custom_call.1} parent=1 // pred_check_branch
      %18 = sbr.rel (0) target = $region9
    $region8: #{tpu_custom_call.1} parent=1 // pred_region
      _
    $region9: #{tpu_custom_call.1} parent=1 // pred_fallthru
      _
    // Predicated region
    $region10: #{tpu_custom_call.1} parent=1 // pred_check
      _
    $region11: #{tpu_custom_call.1} parent=1 // pred_check_branch
      %20 = sbr.rel (0) target = $region13
    $region12: #{tpu_custom_call.1} parent=1 // pred_region
      _
    $region13: #{tpu_custom_call.1} parent=1 // pred_fallthru
      _
    // Predicated region
    $region14: #{tpu_custom_call.1} parent=1 // pred_check
      _
    $region15: #{tpu_custom_call.1} parent=1 // pred_check_branch
      %22 = sbr.rel (0) target = $region17
    $region16: #{tpu_custom_call.1} parent=1 // pred_region
      _
    $region17: #{tpu_custom_call.1} parent=1 // pred_fallthru
      _
    // Predicated region
    $region18: #{tpu_custom_call.1} parent=1 // pred_check
      _
    $region19: #{tpu_custom_call.1} parent=1 // pred_check_branch
      %24 = sbr.rel (0) target = $region21
    $region20: #{tpu_custom_call.1} parent=1 // pred_region
      _
    $region21: #{tpu_custom_call.1} parent=1 // pred_fallthru
      _
    // Predicated region
    $region22: #{tpu_custom_call.1} parent=1 // pred_check
      _
    $region23: #{tpu_custom_call.1} parent=1 // pred_check_branch
      %26 = sbr.rel (0) target = $region25
    $region24: #{tpu_custom_call.1} parent=1 // pred_region
      _
    $region25: #{tpu_custom_call.1} parent=1 // pred_fallthru
      _
    // Predicated region
    $region26: #{tpu_custom_call.1} parent=1 // pred_check
      _
    $region27: #{tpu_custom_call.1} parent=1 // pred_check_branch
      %28 = sbr.rel (0) target = $region29
    $region28: #{tpu_custom_call.1} parent=1 // pred_region
      _
    $region29: #{tpu_custom_call.1} parent=1 // pred_fallthru
      _
    %v29 = vld [vmem:[%s1] sm:$0xff]
    %v30 = vld [vmem:[%s1 + $0x8] sm:$0xff]
    %v31 = vld [vmem:[%s1 + $0x10] sm:$0xff]
    %v32 = vld [vmem:[%s1 + $0x18] sm:$0xff]
    %v33 = vld [vmem:[%s0] sm:$0xff]
    %v34 = vld [vmem:[%s0 + $0x8] sm:$0xff]
    %v35 = vld [vmem:[%s0 + $0x10] sm:$0xff]
    %v36 = vld [vmem:[%s0 + $0x18] sm:$0xff]
    %v37 = vld [vmem:[%s0 + $0x20] sm:$0xff]
    %v38 = vld [vmem:[%s0 + $0x28] sm:$0xff]
    %v39 = vld [vmem:[%s0 + $0x30] sm:$0xff]
    %v40 = vld [vmem:[%s0 + $0x38] sm:$0xff]
    %v41 = vld [vmem:[%s0 + $0x40] sm:$0xff]
    %v42 = vld [vmem:[%s0 + $0x48] sm:$0xff]
    %v43 = vld [vmem:[%s0 + $0x50] sm:$0xff]
    %v44 = vld [vmem:[%s0 + $0x58] sm:$0xff]
    %v45 = vld [vmem:[%s0 + $0x60] sm:$0xff]
    %v46 = vld [vmem:[%s0 + $0x68] sm:$0xff]
    %v47 = vld [vmem:[%s0 + $0x70] sm:$0xff]
    %v48 = vld [vmem:[%s0 + $0x78] sm:$0xff]
    %v49 = vld [vmem:[%s2] sm:$0xff]
    %v50 = vld [vmem:[%s2 + $0x8] sm:$0xff]
    %v51 = vld [vmem:[%s2 + $0x10] sm:$0xff]
    %v52 = vld [vmem:[%s2 + $0x18] sm:$0xff]
    %54 = vset.pattern.permute.xlu0 0
    %55 = vperm.xlu0 %54, %v49
    %v56 = vpop.permute.xlu0 %55
    %59 = vset.pattern.permute.xlu0 0
    %60 = vperm.xlu0 %59, %v50
    %v61 = vpop.permute.xlu0 %60
    %64 = vset.pattern.permute.xlu0 0
    %65 = vperm.xlu0 %64, %v51
    %v66 = vpop.permute.xlu0 %65
    %69 = vset.pattern.permute.xlu0 0
    %70 = vperm.xlu0 %69, %v52
    %v71 = vpop.permute.xlu0 %70
    %vm73 = vcmask 15360
    %v75 = vsel %vm73, %v29, 0
    %v78 = vsel %vm73, %v30, 0
    %v81 = vsel %vm73, %v31, 0
    %v84 = vsel %vm73, %v32, 0
    %v87 = vsel %vm73, %v33, 0
    %v90 = vsel %vm73, %v34, 0
    %v93 = vsel %vm73, %v35, 0
    %v96 = vsel %vm73, %v36, 0
    %v99 = vsel %vm73, %v37, 0
    %v102 = vsel %vm73, %v38, 0
    %v105 = vsel %vm73, %v39, 0
    %v108 = vsel %vm73, %v40, 0
    %v111 = vsel %vm73, %v41, 0
    %v114 = vsel %vm73, %v42, 0
    %v117 = vsel %vm73, %v43, 0
    %v120 = vsel %vm73, %v44, 0
    %v123 = vsel %vm73, %v45, 0
    %v126 = vsel %vm73, %v46, 0
    %v129 = vsel %vm73, %v47, 0
    %v132 = vsel %vm73, %v48, 0
    %134 = vmatprep.subr.mxu0 0.0
    %135 = vmatpush1.xpose.msra.mxu0 %v87
    %136 = vmatprep.subr.mxu0 0.0
    %137 = vmatpush1.xpose.msra.mxu0 %v90
    %138 = vmatprep.subr.mxu0 0.0
    %139 = vmatpush1.xpose.msra.mxu0 %v93
    %140 = vmatprep.subr.mxu0 0.0
    %141 = vmatpush1.xpose.msra.mxu0 %v96
    %142 = vmatprep.subr.mxu0 0.0
    %143 = vmatpush1.xpose.msra.mxu0 %v99
    %144 = vmatprep.subr.mxu0 0.0
    %145 = vmatpush1.xpose.msra.mxu0 %v102
    %146 = vmatprep.subr.mxu0 0.0
    %147 = vmatpush1.xpose.msra.mxu0 %v105
    %148 = vmatprep.subr.mxu0 0.0
    %149 = vmatpush1.xpose.msra.mxu0 %v108
    %150 = vmatprep.subr.mxu0 0.0
    %151 = vmatpush1.xpose.msra.mxu0 %v111
    %152 = vmatprep.subr.mxu0 0.0
    %153 = vmatpush1.xpose.msra.mxu0 %v114
    %154 = vmatprep.subr.mxu0 0.0
    %155 = vmatpush1.xpose.msra.mxu0 %v117
    %156 = vmatprep.subr.mxu0 0.0
    %157 = vmatpush1.xpose.msra.mxu0 %v120
    %158 = vmatprep.subr.mxu0 0.0
    %159 = vmatpush1.xpose.msra.mxu0 %v123
    %160 = vmatprep.subr.mxu0 0.0
    %161 = vmatpush1.xpose.msra.mxu0 %v126
    %162 = vmatprep.subr.mxu0 0.0
    %163 = vmatpush1.xpose.msra.mxu0 %v129
    %164 = vmatprep.subr.mxu0 0.0
    %165 = vmatpush1.xpose.msra.mxu0 %v132
    %166 = vmatprep.subr.mxu0 0.0
    %167 = vmatpush1.xpose.msra.mxu0 0.0
    %168 = vmatprep.subr.mxu0 0.0
    %169 = vmatpush1.xpose.msra.mxu0 0.0
    %170 = vmatprep.subr.mxu0 0.0
    %171 = vmatpush1.xpose.msra.mxu0 0.0
    %172 = vmatprep.subr.mxu0 0.0
    %173 = vmatpush1.xpose.msra.mxu0 0.0
    %174 = vmatprep.subr.mxu0 0.0
    %175 = vmatpush1.xpose.msra.mxu0 0.0
    %176 = vmatprep.subr.mxu0 0.0
    %177 = vmatpush1.xpose.msra.mxu0 0.0
    %178 = vmatprep.subr.mxu0 0.0
    %179 = vmatpush1.xpose.msra.mxu0 0.0
    %180 = vmatprep.subr.mxu0 0.0
    %181 = vmatpush1.xpose.msra.mxu0 0.0
    %182 = vmatprep.subr.mxu0 0.0
    %183 = vmatpush1.xpose.msra.mxu0 0.0
    %184 = vmatprep.subr.mxu0 0.0
    %185 = vmatpush1.xpose.msra.mxu0 0.0
    %186 = vmatprep.subr.mxu0 0.0
    %187 = vmatpush1.xpose.msra.mxu0 0.0
    %188 = vmatprep.subr.mxu0 0.0
    %189 = vmatpush1.xpose.msra.mxu0 0.0
    %190 = vmatprep.subr.mxu0 0.0
    %191 = vmatpush1.xpose.msra.mxu0 0.0
    %192 = vmatprep.subr.mxu0 0.0
    %193 = vmatpush1.xpose.msra.mxu0 0.0
    %194 = vmatprep.subr.mxu0 0.0
    %195 = vmatpush1.xpose.msra.mxu0 0.0
    %196 = vmatprep.subr.mxu0 0.0
    %197 = vmatpush1.xpose.msra.mxu0 0.0
    %198 = vmatprep.mubr.f32.mxu0 0.0
    %199 = vmatmul.mubr.f32.gmra.mrb[0].mxu0 %v75
    %v200 = vpop.f32.mrb[0].mxu0
    %v201 = vadd.f32 %v56, %v200
    %v202 = vpop.f32.mrb[0].mxu0
    %203 = vmatprep.mubr.f32.mxu0 0.0
    %204 = vmatmul.mubr.f32.gmra.mrb[0].mxu0 %v78
    %v205 = vpop.f32.mrb[0].mxu0
    %v206 = vadd.f32 %v61, %v205
    %v207 = vpop.f32.mrb[0].mxu0
    %208 = vmatprep.mubr.f32.mxu0 0.0
    %209 = vmatmul.mubr.f32.gmra.mrb[0].mxu0 %v81
    %v210 = vpop.f32.mrb[0].mxu0
    %v211 = vadd.f32 %v66, %v210
    %v212 = vpop.f32.mrb[0].mxu0
    %213 = vmatprep.mubr.f32.mxu0 0.0
    %214 = vmatmul.mubr.f32.gmra.mrb[0].mxu0 %v84
    %v215 = vpop.f32.mrb[0].mxu0
    %v216 = vadd.f32 %v71, %v215
    %v217 = vpop.f32.mrb[0].mxu0
    %218 = vdwg.mxu0
    %v219 = vmul.f32 %v201, 0.5
    %v220 = vmul.f32 %v206, 0.5
    %v221 = vmul.f32 %v211, 0.5
    %v222 = vmul.f32 %v216, 0.5
    %v223 = vtanh.pop %v219
    %v224 = vtanh.pop %v220
    %v225 = vtanh.pop %v221
    %v226 = vtanh.pop %v222
    %v227 = vadd.f32 %v223, 1.0
    %v228 = vadd.f32 %v224, 1.0
    %v229 = vadd.f32 %v225, 1.0
    %v230 = vadd.f32 %v226, 1.0
    %v231 = vmul.f32 %v227, 0.5
    %v232 = vmul.f32 %v228, 0.5
    %v233 = vmul.f32 %v229, 0.5
    %v234 = vmul.f32 %v230, 0.5
    %v235 = vld [vmem:[%s3] sm:$0xff]
    %v236 = vld [vmem:[%s3 + $0x8] sm:$0xff]
    %v237 = vld [vmem:[%s3 + $0x10] sm:$0xff]
    %v238 = vld [vmem:[%s3 + $0x18] sm:$0xff]
    %v239 = vld [vmem:[%s4] sm:$0xff]
    %v240 = vld [vmem:[%s4 + $0x8] sm:$0xff]
    %v241 = vld [vmem:[%s4 + $0x10] sm:$0xff]
    %v242 = vld [vmem:[%s4 + $0x18] sm:$0xff]
    %244 = vset.pattern.permute.xlu0 0
    %245 = vperm.xlu0 %244, %v239
    %v246 = vpop.permute.xlu0 %245
    %249 = vset.pattern.permute.xlu0 0
    %250 = vperm.xlu0 %249, %v240
    %v251 = vpop.permute.xlu0 %250
    %254 = vset.pattern.permute.xlu0 0
    %255 = vperm.xlu0 %254, %v241
    %v256 = vpop.permute.xlu0 %255
    %259 = vset.pattern.permute.xlu0 0
    %260 = vperm.xlu0 %259, %v242
    %v261 = vpop.permute.xlu0 %260
    %vm263 = vcmask 261120
    %v265 = vsel %vm263, %v235, 0
    %v268 = vsel %vm263, %v236, 0
    %v271 = vsel %vm263, %v237, 0
    %v274 = vsel %vm263, %v238, 0
    %276 = vmatprep.subr.mxu0 0.0
    %277 = vmatpush1.msra.mxu0 %v231
    %278 = vmatprep.subr.mxu0 0.0
    %279 = vmatpush1.msra.mxu0 %v232
    %280 = vmatprep.subr.mxu0 0.0
    %281 = vmatpush1.msra.mxu0 %v233
    %282 = vmatprep.subr.mxu0 0.0
    %283 = vmatpush1.msra.mxu0 %v234
    %284 = vmatprep.subr.mxu0 0.0
    %285 = vmatpush1.msra.mxu0 0.0
    %286 = vmatprep.subr.mxu0 0.0
    %287 = vmatpush1.msra.mxu0 0.0
    %288 = vmatprep.subr.mxu0 0.0
    %289 = vmatpush1.msra.mxu0 0.0
    %290 = vmatprep.subr.mxu0 0.0
    %291 = vmatpush1.msra.mxu0 0.0
    %292 = vmatprep.subr.mxu0 0.0
    %293 = vmatpush1.msra.mxu0 0.0
    %294 = vmatprep.subr.mxu0 0.0
    %295 = vmatpush1.msra.mxu0 0.0
    %296 = vmatprep.subr.mxu0 0.0
    %297 = vmatpush1.msra.mxu0 0.0
    %298 = vmatprep.subr.mxu0 0.0
    %299 = vmatpush1.msra.mxu0 0.0
    %300 = vmatprep.subr.mxu0 0.0
    %301 = vmatpush1.msra.mxu0 0.0
    %302 = vmatprep.subr.mxu0 0.0
    %303 = vmatpush1.msra.mxu0 0.0
    %304 = vmatprep.subr.mxu0 0.0
    %305 = vmatpush1.msra.mxu0 0.0
    %306 = vmatprep.subr.mxu0 0.0
    %307 = vmatpush1.msra.mxu0 0.0
    %308 = vmatprep.subr.mxu0 0.0
    %309 = vmatpush1.msra.mxu0 0.0
    %310 = vmatprep.subr.mxu0 0.0
    %311 = vmatpush1.msra.mxu0 0.0
    %312 = vmatprep.subr.mxu0 0.0
    %313 = vmatpush1.msra.mxu0 0.0
    %314 = vmatprep.subr.mxu0 0.0
    %315 = vmatpush1.msra.mxu0 0.0
    %316 = vmatprep.subr.mxu0 0.0
    %317 = vmatpush1.msra.mxu0 0.0
    %318 = vmatprep.subr.mxu0 0.0
    %319 = vmatpush1.msra.mxu0 0.0
    %320 = vmatprep.subr.mxu0 0.0
    %321 = vmatpush1.msra.mxu0 0.0
    %322 = vmatprep.subr.mxu0 0.0
    %323 = vmatpush1.msra.mxu0 0.0
    %324 = vmatprep.subr.mxu0 0.0
    %325 = vmatpush1.msra.mxu0 0.0
    %326 = vmatprep.subr.mxu0 0.0
    %327 = vmatpush1.msra.mxu0 0.0
    %328 = vmatprep.subr.mxu0 0.0
    %329 = vmatpush1.msra.mxu0 0.0
    %330 = vmatprep.subr.mxu0 0.0
    %331 = vmatpush1.msra.mxu0 0.0
    %332 = vmatprep.subr.mxu0 0.0
    %333 = vmatpush1.msra.mxu0 0.0
    %334 = vmatprep.subr.mxu0 0.0
    %335 = vmatpush1.msra.mxu0 0.0
    %336 = vmatprep.subr.mxu0 0.0
    %337 = vmatpush1.msra.mxu0 0.0
    %338 = vmatprep.subr.mxu0 0.0
    %339 = vmatpush1.msra.mxu0 0.0
    %340 = vmatprep.mubr.f32.mxu0 0.0
    %341 = vmatmul.mubr.f32.gmra.mrb[0].mxu0 %v265
    %v342 = vpop.f32.mrb[0].mxu0
    %v343 = vadd.f32 %v246, %v342
    %v344 = vpop.f32.mrb[0].mxu0
    %345 = vmatprep.mubr.f32.mxu0 0.0
    %346 = vmatmul.mubr.f32.gmra.mrb[0].mxu0 %v268
    %v347 = vpop.f32.mrb[0].mxu0
    %v348 = vadd.f32 %v251, %v347
    %v349 = vpop.f32.mrb[0].mxu0
    %350 = vmatprep.mubr.f32.mxu0 0.0
    %351 = vmatmul.mubr.f32.gmra.mrb[0].mxu0 %v271
    %v352 = vpop.f32.mrb[0].mxu0
    %v353 = vadd.f32 %v256, %v352
    %v354 = vpop.f32.mrb[0].mxu0
    %355 = vmatprep.mubr.f32.mxu0 0.0
    %356 = vmatmul.mubr.f32.gmra.mrb[0].mxu0 %v274
    %v357 = vpop.f32.mrb[0].mxu0
    %v358 = vadd.f32 %v261, %v357
    %v359 = vpop.f32.mrb[0].mxu0
    %360 = vdwg.mxu0
    %v361 = vmul.f32 %v343, 0.5
    %v362 = vmul.f32 %v348, 0.5
    %v363 = vmul.f32 %v353, 0.5
    %v364 = vmul.f32 %v358, 0.5
    %v365 = vtanh.pop %v361
    %v366 = vtanh.pop %v362
    %v367 = vtanh.pop %v363
    %v368 = vtanh.pop %v364
    %v369 = vadd.f32 %v365, 1.0
    %v370 = vadd.f32 %v366, 1.0
    %v371 = vadd.f32 %v367, 1.0
    %v372 = vadd.f32 %v368, 1.0
    %v373 = vmul.f32 %v369, 0.5
    %v374 = vmul.f32 %v370, 0.5
    %v375 = vmul.f32 %v371, 0.5
    %v376 = vmul.f32 %v372, 0.5
    %s377 = scalar_lea.vmem %s3, 32
    %v378 = vld [vmem:[%s377] sm:$0xff]
    %v379 = vld [vmem:[%s377 + $0x8] sm:$0xff]
    %v380 = vld [vmem:[%s377 + $0x10] sm:$0xff]
    %v381 = vld [vmem:[%s377 + $0x18] sm:$0xff]
    %s382 = scalar_lea.vmem %s4, 32
    %v383 = vld [vmem:[%s382] sm:$0xff]
    %v384 = vld [vmem:[%s382 + $0x8] sm:$0xff]
    %v385 = vld [vmem:[%s382 + $0x10] sm:$0xff]
    %v386 = vld [vmem:[%s382 + $0x18] sm:$0xff]
    %388 = vset.pattern.permute.xlu0 0
    %389 = vperm.xlu0 %388, %v383
    %v390 = vpop.permute.xlu0 %389
    %393 = vset.pattern.permute.xlu0 0
    %394 = vperm.xlu0 %393, %v384
    %v395 = vpop.permute.xlu0 %394
    %398 = vset.pattern.permute.xlu0 0
    %399 = vperm.xlu0 %398, %v385
    %v400 = vpop.permute.xlu0 %399
    %403 = vset.pattern.permute.xlu0 0
    %404 = vperm.xlu0 %403, %v386
    %v405 = vpop.permute.xlu0 %404
    %v408 = vsel %vm263, %v378, 0
    %v411 = vsel %vm263, %v379, 0
    %v414 = vsel %vm263, %v380, 0
    %v417 = vsel %vm263, %v381, 0
    %419 = vmatprep.subr.mxu0 0.0
    %420 = vmatpush1.msra.mxu0 %v373
    %421 = vmatprep.subr.mxu0 0.0
    %422 = vmatpush1.msra.mxu0 %v374
    %423 = vmatprep.subr.mxu0 0.0
    %424 = vmatpush1.msra.mxu0 %v375
    %425 = vmatprep.subr.mxu0 0.0
    %426 = vmatpush1.msra.mxu0 %v376
    %427 = vmatprep.subr.mxu0 0.0
    %428 = vmatpush1.msra.mxu0 0.0
    %429 = vmatprep.subr.mxu0 0.0
    %430 = vmatpush1.msra.mxu0 0.0
    %431 = vmatprep.subr.mxu0 0.0
    %432 = vmatpush1.msra.mxu0 0.0
    %433 = vmatprep.subr.mxu0 0.0
    %434 = vmatpush1.msra.mxu0 0.0
    %435 = vmatprep.subr.mxu0 0.0
    %436 = vmatpush1.msra.mxu0 0.0
    %437 = vmatprep.subr.mxu0 0.0
    %438 = vmatpush1.msra.mxu0 0.0
    %439 = vmatprep.subr.mxu0 0.0
    %440 = vmatpush1.msra.mxu0 0.0
    %441 = vmatprep.subr.mxu0 0.0
    %442 = vmatpush1.msra.mxu0 0.0
    %443 = vmatprep.subr.mxu0 0.0
    %444 = vmatpush1.msra.mxu0 0.0
    %445 = vmatprep.subr.mxu0 0.0
    %446 = vmatpush1.msra.mxu0 0.0
    %447 = vmatprep.subr.mxu0 0.0
    %448 = vmatpush1.msra.mxu0 0.0
    %449 = vmatprep.subr.mxu0 0.0
    %450 = vmatpush1.msra.mxu0 0.0
    %451 = vmatprep.subr.mxu0 0.0
    %452 = vmatpush1.msra.mxu0 0.0
    %453 = vmatprep.subr.mxu0 0.0
    %454 = vmatpush1.msra.mxu0 0.0
    %455 = vmatprep.subr.mxu0 0.0
    %456 = vmatpush1.msra.mxu0 0.0
    %457 = vmatprep.subr.mxu0 0.0
    %458 = vmatpush1.msra.mxu0 0.0
    %459 = vmatprep.subr.mxu0 0.0
    %460 = vmatpush1.msra.mxu0 0.0
    %461 = vmatprep.subr.mxu0 0.0
    %462 = vmatpush1.msra.mxu0 0.0
    %463 = vmatprep.subr.mxu0 0.0
    %464 = vmatpush1.msra.mxu0 0.0
    %465 = vmatprep.subr.mxu0 0.0
    %466 = vmatpush1.msra.mxu0 0.0
    %467 = vmatprep.subr.mxu0 0.0
    %468 = vmatpush1.msra.mxu0 0.0
    %469 = vmatprep.subr.mxu0 0.0
    %470 = vmatpush1.msra.mxu0 0.0
    %471 = vmatprep.subr.mxu0 0.0
    %472 = vmatpush1.msra.mxu0 0.0
    %473 = vmatprep.subr.mxu0 0.0
    %474 = vmatpush1.msra.mxu0 0.0
    %475 = vmatprep.subr.mxu0 0.0
    %476 = vmatpush1.msra.mxu0 0.0
    %477 = vmatprep.subr.mxu0 0.0
    %478 = vmatpush1.msra.mxu0 0.0
    %479 = vmatprep.subr.mxu0 0.0
    %480 = vmatpush1.msra.mxu0 0.0
    %481 = vmatprep.subr.mxu0 0.0
    %482 = vmatpush1.msra.mxu0 0.0
    %483 = vmatprep.mubr.f32.mxu0 0.0
    %484 = vmatmul.mubr.f32.gmra.mrb[0].mxu0 %v408
    %v485 = vpop.f32.mrb[0].mxu0
    %v486 = vadd.f32 %v390, %v485
    %v487 = vpop.f32.mrb[0].mxu0
    %488 = vmatprep.mubr.f32.mxu0 0.0
    %489 = vmatmul.mubr.f32.gmra.mrb[0].mxu0 %v411
    %v490 = vpop.f32.mrb[0].mxu0
    %v491 = vadd.f32 %v395, %v490
    %v492 = vpop.f32.mrb[0].mxu0
    %493 = vmatprep.mubr.f32.mxu0 0.0
    %494 = vmatmul.mubr.f32.gmra.mrb[0].mxu0 %v414
    %v495 = vpop.f32.mrb[0].mxu0
    %v496 = vadd.f32 %v400, %v495
    %v497 = vpop.f32.mrb[0].mxu0
    %498 = vmatprep.mubr.f32.mxu0 0.0
    %499 = vmatmul.mubr.f32.gmra.mrb[0].mxu0 %v417
    %v500 = vpop.f32.mrb[0].mxu0
    %v501 = vadd.f32 %v405, %v500
    %v502 = vpop.f32.mrb[0].mxu0
    %503 = vdwg.mxu0
    %v504 = vmul.f32 %v486, 0.5
    %v505 = vmul.f32 %v491, 0.5
    %v506 = vmul.f32 %v496, 0.5
    %v507 = vmul.f32 %v501, 0.5
    %v508 = vtanh.pop %v504
    %v509 = vtanh.pop %v505
    %v510 = vtanh.pop %v506
    %v511 = vtanh.pop %v507
    %v512 = vadd.f32 %v508, 1.0
    %v513 = vadd.f32 %v509, 1.0
    %v514 = vadd.f32 %v510, 1.0
    %v515 = vadd.f32 %v511, 1.0
    %v516 = vmul.f32 %v512, 0.5
    %v517 = vmul.f32 %v513, 0.5
    %v518 = vmul.f32 %v514, 0.5
    %v519 = vmul.f32 %v515, 0.5
    %v520 = vld [vmem:[%s5] sm:$0x1]
    %v521 = vld [vmem:[#allocation2] sm:$0x1]
    %523 = vset.pattern.permute.xlu0 0
    %524 = vperm.xlu0 %523, %v521
    %v525 = vpop.permute.xlu0 %524
    %v527 = vlaneseq
    %v528 = vshrl.u32 %v527, 7
    %v529 = vsub.s32 0, %v528
    %v530 = vrot.slane %v525, %v529
    %v532 = vsel %vm263, %v520, 0
    %534 = vmatprep.subr.mxu0 0.0
    %535 = vmatpush1.msra.mxu0 %v516
    %536 = vmatprep.subr.mxu0 0.0
    %537 = vmatpush1.msra.mxu0 %v517
    %538 = vmatprep.subr.mxu0 0.0
    %539 = vmatpush1.msra.mxu0 %v518
    %540 = vmatprep.subr.mxu0 0.0
    %541 = vmatpush1.msra.mxu0 %v519
    %542 = vmatprep.subr.mxu0 0.0
    %543 = vmatpush1.msra.mxu0 0.0
    %544 = vmatprep.subr.mxu0 0.0
    %545 = vmatpush1.msra.mxu0 0.0
    %546 = vmatprep.subr.mxu0 0.0
    %547 = vmatpush1.msra.mxu0 0.0
    %548 = vmatprep.subr.mxu0 0.0
    %549 = vmatpush1.msra.mxu0 0.0
    %550 = vmatprep.subr.mxu0 0.0
    %551 = vmatpush1.msra.mxu0 0.0
    %552 = vmatprep.subr.mxu0 0.0
    %553 = vmatpush1.msra.mxu0 0.0
    %554 = vmatprep.subr.mxu0 0.0
    %555 = vmatpush1.msra.mxu0 0.0
    %556 = vmatprep.subr.mxu0 0.0
    %557 = vmatpush1.msra.mxu0 0.0
    %558 = vmatprep.subr.mxu0 0.0
    %559 = vmatpush1.msra.mxu0 0.0
    %560 = vmatprep.subr.mxu0 0.0
    %561 = vmatpush1.msra.mxu0 0.0
    %562 = vmatprep.subr.mxu0 0.0
    %563 = vmatpush1.msra.mxu0 0.0
    %564 = vmatprep.subr.mxu0 0.0
    %565 = vmatpush1.msra.mxu0 0.0
    %566 = vmatprep.subr.mxu0 0.0
    %567 = vmatpush1.msra.mxu0 0.0
    %568 = vmatprep.subr.mxu0 0.0
    %569 = vmatpush1.msra.mxu0 0.0
    %570 = vmatprep.subr.mxu0 0.0
    %571 = vmatpush1.msra.mxu0 0.0
    %572 = vmatprep.subr.mxu0 0.0
    %573 = vmatpush1.msra.mxu0 0.0
    %574 = vmatprep.subr.mxu0 0.0
    %575 = vmatpush1.msra.mxu0 0.0
    %576 = vmatprep.subr.mxu0 0.0
    %577 = vmatpush1.msra.mxu0 0.0
    %578 = vmatprep.subr.mxu0 0.0
    %579 = vmatpush1.msra.mxu0 0.0
    %580 = vmatprep.subr.mxu0 0.0
    %581 = vmatpush1.msra.mxu0 0.0
    %582 = vmatprep.subr.mxu0 0.0
    %583 = vmatpush1.msra.mxu0 0.0
    %584 = vmatprep.subr.mxu0 0.0
    %585 = vmatpush1.msra.mxu0 0.0
    %586 = vmatprep.subr.mxu0 0.0
    %587 = vmatpush1.msra.mxu0 0.0
    %588 = vmatprep.subr.mxu0 0.0
    %589 = vmatpush1.msra.mxu0 0.0
    %590 = vmatprep.subr.mxu0 0.0
    %591 = vmatpush1.msra.mxu0 0.0
    %592 = vmatprep.subr.mxu0 0.0
    %593 = vmatpush1.msra.mxu0 0.0
    %594 = vmatprep.subr.mxu0 0.0
    %595 = vmatpush1.msra.mxu0 0.0
    %596 = vmatprep.subr.mxu0 0.0
    %597 = vmatpush1.msra.mxu0 0.0
    %598 = vmatprep.mubr.f32.mxu0 0.0
    %599 = vmatmul.mubr.f32.gmra.mrb[0].mxu0 %v532
    %v600 = vpop.f32.mrb[0].mxu0
    %v601 = vadd.f32 %v530, %v600
    %v602 = vpop.f32.mrb[0].mxu0
    %603 = vdwg.mxu0
    %604 = vst [vmem:[#allocation3] sm:$0x1] %v601
    // Predicated region
    $region30: #{tpu_custom_call.1} parent=1 // pred_check
      _
    $region31: #{tpu_custom_call.1} parent=1 // pred_check_branch
      %606 = sbr.rel (0) target = $region33
    $region32: #{tpu_custom_call.1} parent=1 // pred_region
      %s608 = ssub.s32 16, 16
      %609 = vsyncadd [#allocation4], %s608
      %s611 = sshll.u32 [#allocation3], 4
      %s612 = int_to_ptr.vmem [resolvable:$true] %s611
      %614 = dma.vmem_to_hbm [thread:$0]  %s612, 16, %s7, [#allocation4]
    $region33: #{tpu_custom_call.1} parent=1 // pred_fallthru
      _
    // Predicated region
    $region34: #{tpu_custom_call.1} parent=1 // pred_check
      _
    $region35: #{tpu_custom_call.1} parent=1 // pred_check_branch
      %616 = sbr.rel (0) target = $region37
    $region36: #{tpu_custom_call.1} parent=1 // pred_region
      %617 = dma.done [#allocation4], 16
    $region37: #{tpu_custom_call.1} parent=1 // pred_fallthru
      _
    %618 = vsyncpa [#allocation4], 1

</llo_original>
